<compile_context>
chip_gen: v7x
topology: tpu7x:2x2x1
jax: 0.10.0
libtpu: 0.0.40
codegen_flags: <defaults>
</compile_context>

<pallas_src>
import functools

import jax
import jax.numpy as jnp
import numpy as np
from jax import lax
from jax.experimental import pallas as pl
from jax.experimental.pallas import tpu as pltpu


_UNROLL_MAX = 16  # fully unroll the in-kernel autoregressive loop up to this D


# ---------------------------------------------------------------------------
# Pallas kernel: full MAF forward (autoregressive loop) for one batch tile.
# The column order has already been permuted to identity by the wrapper.
# ---------------------------------------------------------------------------
def _maf_kernel(u_ref, w0_ref, b0_ref, w1s_ref, b1s_ref, x_ref, logd_ref,
                *, dim, mm_dtype):
    u = u_ref[...]                                   # (TB, D) f32
    tb = u.shape[0]
    hdim = b0_ref.shape[1]

    col_ids = lax.broadcasted_iota(jnp.int32, (tb, dim), 1)

    # b0 folded into the h_pre initializer (hoisted bias broadcast).
    h_pre0 = jnp.broadcast_to(b0_ref[...], (tb, hdim)).astype(jnp.float32)
    x0 = jnp.zeros((tb, dim), jnp.float32)
    logd0 = jnp.zeros((tb, 1), jnp.float32)

    def step(i, carry, u_col):
        x, h_pre, logd = carry
        # MADE layer 0 activation (pre-activation carried incrementally).
        h = jnp.maximum(h_pre, 0.0)
        # MADE layer 1: only the two needed output columns (mu_t, log_sigma_t).
        w_pair = w1s_ref[i]                          # (H, 2)  mm_dtype
        b_pair = b1s_ref[pl.ds(i, 1), :]             # (1, 2)  f32
        out = jnp.dot(h.astype(mm_dtype), w_pair,
                      preferred_element_type=jnp.float32) + b_pair
        mu_t = out[:, 0:1]                           # (TB, 1)
        log_sigma_t = out[:, 1:2]                    # (TB, 1)

        new_col = u_col * jnp.exp(log_sigma_t) + mu_t
        x = jnp.where(col_ids == i, new_col, x)      # x[:, i] = new_col (value-carried)
        # Rank-1 update of the layer-0 pre-activation (VPU, f32).
        w0_row = w0_ref[pl.ds(i, 1), :]              # (1, H)
        h_pre = h_pre + new_col * w0_row
        logd = logd + log_sigma_t
        return x, h_pre, logd

    carry = (x0, h_pre0, logd0)
    if dim <= _UNROLL_MAX:
        # Small D: full static unroll, static lane slice of u.
        for i in range(dim):
            carry = step(i, carry, u[:, i:i + 1])
    else:
        # Large D: bounded code size; dynamic column of u via masked reduce.
        def body(i, c):
            u_col = jnp.sum(jnp.where(col_ids == i, u, 0.0), axis=1,
                            keepdims=True)
            return step(i, c, u_col)
        carry = lax.fori_loop(0, dim, body, carry, unroll=2)

    x, _, logd = carry
    x_ref[...] = x                                   # single lane-dense store
    logd_ref[...] = logd


# ---------------------------------------------------------------------------
# Wrapper (glue): weight prep (permutation + per-step column selection),
# batch tiling, BlockSpecs, pallas_call.
# ---------------------------------------------------------------------------
def maf_forward(u, w0_masked, b0, w1_masked, b1, order,
                *, batch_tile=512, matmul_dtype=jnp.bfloat16):
    u = jnp.asarray(u, jnp.float32)
    B, D = u.shape
    H = w0_masked.shape[1]

    order = np.asarray(order, dtype=np.int64)
    inv = np.argsort(order)                          # inv[t] = step index of coord t

    # --- wrapper-side weight prep (constant layout work) ---------------------
    u_perm = u[:, order]                             # column i == coord order[i]
    w0_perm = jnp.asarray(w0_masked, jnp.float32)[order, :]            # (D, H)
    b0 = jnp.asarray(b0, jnp.float32).reshape(1, H)
    cols = np.stack([order, order + D], axis=1)      # (D, 2): [t, D + t]
    w1_sel = jnp.transpose(jnp.asarray(w1_masked, jnp.float32)[:, cols],
                           (1, 0, 2)).astype(matmul_dtype)             # (D, H, 2)
    b1_sel = jnp.asarray(b1, jnp.float32).reshape(-1)[cols]            # (D, 2)

    # --- batch tiling ---------------------------------------------------------
    if B <= batch_tile:
        TB = B                                       # single tile == full extent
    else:
        TB = max(8, (batch_tile // 8) * 8)
        pad = (-B) % TB
        if pad:
            u_perm = jnp.pad(u_perm, ((0, pad), (0, 0)))
    Bp = u_perm.shape[0]
    grid = (Bp // TB,)

    # VMEM budget: resident weights + double-buffered activation tiles.
    weight_bytes = (w0_perm.size * 4 + b0.size * 4 + b1_sel.size * 4 +
                    w1_sel.size * w1_sel.dtype.itemsize)
    act_bytes = TB * (2 * D + 1) * 4 * 2             # u + x (+ logd), double-buffered
    vmem_limit = int(min(48 * 1024 * 1024,
                         max(16 * 1024 * 1024, 2 * (weight_bytes + act_bytes))))

    kernel = functools.partial(_maf_kernel, dim=D, mm_dtype=matmul_dtype)

    x_perm, logd = pl.pallas_call(
        kernel,
        out_shape=(
            jax.ShapeDtypeStruct((Bp, D), jnp.float32),
            jax.ShapeDtypeStruct((Bp, 1), jnp.float32),
        ),
        grid=grid,
        in_specs=[
            pl.BlockSpec((TB, D), lambda i: (i, 0)),       # batch-tiled input
            pl.BlockSpec((D, H), lambda i: (0, 0)),        # VMEM-resident weights
            pl.BlockSpec((1, H), lambda i: (0, 0)),
            pl.BlockSpec((D, H, 2), lambda i: (0, 0, 0)),
            pl.BlockSpec((D, 2), lambda i: (0, 0)),
        ],
        out_specs=(
            pl.BlockSpec((TB, D), lambda i: (i, 0)),
            pl.BlockSpec((TB, 1), lambda i: (i, 0)),
        ),
        compiler_params=pltpu.CompilerParams(
            dimension_semantics=("parallel",),
            vmem_limit_bytes=vmem_limit),
    )(u_perm, w0_perm, b0, w1_sel, b1_sel)

    x = x_perm[:B, :][:, inv]                        # un-pad + un-permute columns
    return x, logd[:B, 0]


# ---------------------------------------------------------------------------
# MADE mask construction + deterministic parameter init (plain JAX/NumPy glue)
# ---------------------------------------------------------------------------
def build_made_masks(dim, hidden, order):
    inv = np.empty(dim, dtype=np.int64)
    for pos, d in enumerate(order):
        inv[d] = pos
    deg_in = inv                                        # degree of input unit d
    deg_hid = np.arange(hidden) % max(1, dim - 1)       # hidden degrees (cyclic)
    mask0 = (deg_hid[None, :] >= deg_in[:, None]).astype(np.float32)       # (D, H)
    deg_out = inv
    mask1_half = (deg_out[None, :] > deg_hid[:, None]).astype(np.float32)  # (H, D)
    mask1 = np.concatenate([mask1_half, mask1_half], axis=1)               # (H, 2D)
    return mask0, mask1


def init_params(key, dim, hidden):
    k0, k1, k2, k3 = jax.random.split(key, 4)
    w0 = 0.1 * jax.random.normal(k0, (dim, hidden), jnp.float32)
    b0 = 0.1 * jax.random.normal(k1, (1, hidden), jnp.float32)
    w1 = 0.1 * jax.random.normal(k2, (hidden, 2 * dim), jnp.float32)
    b1 = 0.1 * jax.random.normal(k3, (1, 2 * dim), jnp.float32)
    return w0, b0, w1, b1


# ---------------------------------------------------------------------------
# Pure-JAX reference (mirrors the PyTorch forward) for the correctness check.
# ---------------------------------------------------------------------------
def maf_forward_ref(u, w0m, b0, w1m, b1, order):
    B, D = u.shape
    x = jnp.zeros_like(u)
    logd = jnp.zeros((B,), jnp.float32)
    for i in range(D):
        t = int(order[i])
        h = jnp.maximum(x @ w0m + b0, 0.0)
        out = h @ w1m + b1
        mu, log_sigma = out[:, :D], out[:, D:]
        x = x.at[:, t].set(u[:, t] * jnp.exp(log_sigma[:, t]) + mu[:, t])
        logd = logd + log_sigma[:, t]
    return x, logd


if __name__ == "__main__":
    dim = 4
    hidden = 32
    batch = 2

    key = jax.random.PRNGKey(0)
    k_u, k_p = jax.random.split(key)
    u = jax.random.normal(k_u, (batch, dim), jnp.float32)
    w0, b0, w1, b1 = init_params(k_p, dim, hidden)

    for order in (list(range(dim)), [2, 0, 3, 1]):   # default + non-trivial order
        mask0, mask1 = build_made_masks(dim, hidden, order)
        w0_masked = w0 * jnp.asarray(mask0)          # pre-apply binary MADE masks
        w1_masked = w1 * jnp.asarray(mask1)

        x_ref, logd_ref = maf_forward_ref(u, w0_masked, b0, w1_masked, b1, order)

        # f32 MXU-operand variant: tight check against the pure-JAX reference.
        x32, logd32 = maf_forward(u, w0_masked, b0, w1_masked, b1, order,
                                  matmul_dtype=jnp.float32)
        jax.block_until_ready((x32, logd32))
        np.testing.assert_allclose(np.asarray(x32), np.asarray(x_ref),
                                   rtol=1e-4, atol=1e-5)
        np.testing.assert_allclose(np.asarray(logd32), np.asarray(logd_ref),
                                   rtol=1e-4, atol=1e-5)

    # Default (bf16 MXU operands, f32 accumulate): loose tolerance, one order.
    order = [2, 0, 3, 1]
    mask0, mask1 = build_made_masks(dim, hidden, order)
    w0_masked = w0 * jnp.asarray(mask0)
    w1_masked = w1 * jnp.asarray(mask1)
    x_ref, logd_ref = maf_forward_ref(u, w0_masked, b0, w1_masked, b1, order)
    x, logd = maf_forward(u, w0_masked, b0, w1_masked, b1, order)
    jax.block_until_ready((x, logd))
    np.testing.assert_allclose(np.asarray(x), np.asarray(x_ref),
                               rtol=2e-2, atol=2e-2)
    np.testing.assert_allclose(np.asarray(logd), np.asarray(logd_ref),
                               rtol=2e-2, atol=2e-2)

    print("KERNEL_OK")
</pallas_src>

<mosaic_0001>
module attributes {stable_mosaic.version = 11 : i64} {
  func.func @_maf_kernel(%arg0: i32, %arg1: memref<2x4xf32, #tpu.memory_space<vmem>>, %arg2: memref<4x32xf32, #tpu.memory_space<vmem>>, %arg3: memref<1x32xf32, #tpu.memory_space<vmem>>, %arg4: memref<4x32x2xf32, #tpu.memory_space<vmem>>, %arg5: memref<4x2xf32, #tpu.memory_space<vmem>>, %arg6: memref<2x4xf32, #tpu.memory_space<vmem>>, %arg7: memref<2x1xf32, #tpu.memory_space<vmem>>) attributes {dimension_semantics = [#tpu.dimension_semantics<parallel>], iteration_bounds = array<i64: 1>, scalar_prefetch = 0 : i64, scratch_operands = 0 : i64, tpu.core_type = #tpu.core_type<tc>, window_params = [{transform_indices = @transform_0, window_bounds = array<i64: 2, 4>}, {pipeline_mode = #tpu.pipeline_mode<synchronous>, transform_indices = @transform_1, window_bounds = array<i64: 4, 32>}, {pipeline_mode = #tpu.pipeline_mode<synchronous>, transform_indices = @transform_2, window_bounds = array<i64: 1, 32>}, {pipeline_mode = #tpu.pipeline_mode<synchronous>, transform_indices = @transform_3, window_bounds = array<i64: 4, 32, 2>}, {pipeline_mode = #tpu.pipeline_mode<synchronous>, transform_indices = @transform_4, window_bounds = array<i64: 4, 2>}, {transform_indices = @transform_5, window_bounds = array<i64: 2, 4>}, {transform_indices = @transform_6, window_bounds = array<i64: 2, 1>}]} {
    %c0 = arith.constant 0 : index
    %c0_0 = arith.constant 0 : index
    %0 = vector.load %arg1[%c0, %c0_0] : memref<2x4xf32, #tpu.memory_space<vmem>>, vector<2x4xf32>
    %1 = tpu.iota {dimensions = array<i32: 1>} : vector<2x4xi32>
    %c0_1 = arith.constant 0 : index
    %c0_2 = arith.constant 0 : index
    %2 = vector.load %arg3[%c0_1, %c0_2] : memref<1x32xf32, #tpu.memory_space<vmem>>, vector<1x32xf32>
    %3 = vector.shape_cast %2 : vector<1x32xf32> to vector<1x32xf32>
    %4 = vector.broadcast %3 : vector<1x32xf32> to vector<2x32xf32>
    %cst = arith.constant 0.000000e+00 : f32
    %5 = vector.broadcast %cst : f32 to vector<2x4xf32>
    %cst_3 = arith.constant 0.000000e+00 : f32
    %6 = vector.broadcast %cst_3 : f32 to vector<2x1xf32>
    %7 = vector.extract_strided_slice %0 {offsets = [0, 0], sizes = [2, 1], strides = [1, 1]} : vector<2x4xf32> to vector<2x1xf32>
    %cst_4 = arith.constant 0.000000e+00 : f32
    %8 = vector.broadcast %cst_4 : f32 to vector<2x32xf32>
    %9 = arith.maximumf %4, %8 : vector<2x32xf32>
    %c0_5 = arith.constant 0 : index
    %c0_6 = arith.constant 0 : index
    %c0_7 = arith.constant 0 : index
    %10 = vector.load %arg4[%c0_5, %c0_6, %c0_7] : memref<4x32x2xf32, #tpu.memory_space<vmem>>, vector<1x32x2xf32>
    %11 = vector.shape_cast %10 : vector<1x32x2xf32> to vector<32x2xf32>
    %c0_8 = arith.constant 0 : index
    %c0_9 = arith.constant 0 : index
    %12 = vector.load %arg5[%c0_8, %c0_9] : memref<4x2xf32, #tpu.memory_space<vmem>>, vector<1x2xf32>
    %cst_10 = arith.constant dense<0.000000e+00> : vector<2x2xf32>
    %13 = tpu.matmul %9, %11, %cst_10 {dimension_numbers = #tpu.dot_dimension_numbers<[1], [0], [0], [1], [0, 0, 1, 1], [], []>} : vector<2x32xf32>, vector<32x2xf32>, vector<2x2xf32> -> vector<2x2xf32>
    %14 = vector.broadcast %12 : vector<1x2xf32> to vector<2x2xf32>
    %15 = arith.addf %13, %14 : vector<2x2xf32>
    %16 = vector.extract_strided_slice %15 {offsets = [0, 0], sizes = [2, 1], strides = [1, 1]} : vector<2x2xf32> to vector<2x1xf32>
    %17 = vector.extract_strided_slice %15 {offsets = [0, 1], sizes = [2, 1], strides = [1, 1]} : vector<2x2xf32> to vector<2x1xf32>
    %18 = math.exp %17 : vector<2x1xf32>
    %19 = arith.mulf %7, %18 : vector<2x1xf32>
    %20 = arith.addf %19, %16 : vector<2x1xf32>
    %c0_i32 = arith.constant 0 : i32
    %21 = vector.broadcast %c0_i32 : i32 to vector<2x4xi32>
    %22 = arith.cmpi eq, %1, %21 : vector<2x4xi32>
    %23 = vector.shape_cast %20 : vector<2x1xf32> to vector<2x1xf32>
    %24 = vector.broadcast %23 : vector<2x1xf32> to vector<2x4xf32>
    %25 = arith.select %22, %24, %5 : vector<2x4xi1>, vector<2x4xf32>
    %c0_11 = arith.constant 0 : index
    %c0_12 = arith.constant 0 : index
    %26 = vector.load %arg2[%c0_11, %c0_12] : memref<4x32xf32, #tpu.memory_space<vmem>>, vector<1x32xf32>
    %27 = vector.broadcast %20 : vector<2x1xf32> to vector<2x32xf32>
    %28 = vector.broadcast %26 : vector<1x32xf32> to vector<2x32xf32>
    %29 = arith.mulf %27, %28 : vector<2x32xf32>
    %30 = arith.addf %4, %29 : vector<2x32xf32>
    %31 = arith.addf %6, %17 : vector<2x1xf32>
    %32 = vector.extract_strided_slice %0 {offsets = [0, 1], sizes = [2, 1], strides = [1, 1]} : vector<2x4xf32> to vector<2x1xf32>
    %cst_13 = arith.constant 0.000000e+00 : f32
    %33 = vector.broadcast %cst_13 : f32 to vector<2x32xf32>
    %34 = arith.maximumf %30, %33 : vector<2x32xf32>
    %c1 = arith.constant 1 : index
    %c0_14 = arith.constant 0 : index
    %c0_15 = arith.constant 0 : index
    %35 = vector.load %arg4[%c1, %c0_14, %c0_15] : memref<4x32x2xf32, #tpu.memory_space<vmem>>, vector<1x32x2xf32>
    %36 = vector.shape_cast %35 : vector<1x32x2xf32> to vector<32x2xf32>
    %c1_16 = arith.constant 1 : index
    %c0_17 = arith.constant 0 : index
    %37 = vector.load %arg5[%c1_16, %c0_17] : memref<4x2xf32, #tpu.memory_space<vmem>>, vector<1x2xf32>
    %cst_18 = arith.constant dense<0.000000e+00> : vector<2x2xf32>
    %38 = tpu.matmul %34, %36, %cst_18 {dimension_numbers = #tpu.dot_dimension_numbers<[1], [0], [0], [1], [0, 0, 1, 1], [], []>} : vector<2x32xf32>, vector<32x2xf32>, vector<2x2xf32> -> vector<2x2xf32>
    %39 = vector.broadcast %37 : vector<1x2xf32> to vector<2x2xf32>
    %40 = arith.addf %38, %39 : vector<2x2xf32>
    %41 = vector.extract_strided_slice %40 {offsets = [0, 0], sizes = [2, 1], strides = [1, 1]} : vector<2x2xf32> to vector<2x1xf32>
    %42 = vector.extract_strided_slice %40 {offsets = [0, 1], sizes = [2, 1], strides = [1, 1]} : vector<2x2xf32> to vector<2x1xf32>
    %43 = math.exp %42 : vector<2x1xf32>
    %44 = arith.mulf %32, %43 : vector<2x1xf32>
    %45 = arith.addf %44, %41 : vector<2x1xf32>
    %c1_i32 = arith.constant 1 : i32
    %46 = vector.broadcast %c1_i32 : i32 to vector<2x4xi32>
    %47 = arith.cmpi eq, %1, %46 : vector<2x4xi32>
    %48 = vector.shape_cast %45 : vector<2x1xf32> to vector<2x1xf32>
    %49 = vector.broadcast %48 : vector<2x1xf32> to vector<2x4xf32>
    %50 = arith.select %47, %49, %25 : vector<2x4xi1>, vector<2x4xf32>
    %c1_19 = arith.constant 1 : index
    %c0_20 = arith.constant 0 : index
    %51 = vector.load %arg2[%c1_19, %c0_20] : memref<4x32xf32, #tpu.memory_space<vmem>>, vector<1x32xf32>
    %52 = vector.broadcast %45 : vector<2x1xf32> to vector<2x32xf32>
    %53 = vector.broadcast %51 : vector<1x32xf32> to vector<2x32xf32>
    %54 = arith.mulf %52, %53 : vector<2x32xf32>
    %55 = arith.addf %30, %54 : vector<2x32xf32>
    %56 = arith.addf %31, %42 : vector<2x1xf32>
    %57 = vector.extract_strided_slice %0 {offsets = [0, 2], sizes = [2, 1], strides = [1, 1]} : vector<2x4xf32> to vector<2x1xf32>
    %cst_21 = arith.constant 0.000000e+00 : f32
    %58 = vector.broadcast %cst_21 : f32 to vector<2x32xf32>
    %59 = arith.maximumf %55, %58 : vector<2x32xf32>
    %c2 = arith.constant 2 : index
    %c0_22 = arith.constant 0 : index
    %c0_23 = arith.constant 0 : index
    %60 = vector.load %arg4[%c2, %c0_22, %c0_23] : memref<4x32x2xf32, #tpu.memory_space<vmem>>, vector<1x32x2xf32>
    %61 = vector.shape_cast %60 : vector<1x32x2xf32> to vector<32x2xf32>
    %c2_24 = arith.constant 2 : index
    %c0_25 = arith.constant 0 : index
    %62 = vector.load %arg5[%c2_24, %c0_25] : memref<4x2xf32, #tpu.memory_space<vmem>>, vector<1x2xf32>
    %cst_26 = arith.constant dense<0.000000e+00> : vector<2x2xf32>
    %63 = tpu.matmul %59, %61, %cst_26 {dimension_numbers = #tpu.dot_dimension_numbers<[1], [0], [0], [1], [0, 0, 1, 1], [], []>} : vector<2x32xf32>, vector<32x2xf32>, vector<2x2xf32> -> vector<2x2xf32>
    %64 = vector.broadcast %62 : vector<1x2xf32> to vector<2x2xf32>
    %65 = arith.addf %63, %64 : vector<2x2xf32>
    %66 = vector.extract_strided_slice %65 {offsets = [0, 0], sizes = [2, 1], strides = [1, 1]} : vector<2x2xf32> to vector<2x1xf32>
    %67 = vector.extract_strided_slice %65 {offsets = [0, 1], sizes = [2, 1], strides = [1, 1]} : vector<2x2xf32> to vector<2x1xf32>
    %68 = math.exp %67 : vector<2x1xf32>
    %69 = arith.mulf %57, %68 : vector<2x1xf32>
    %70 = arith.addf %69, %66 : vector<2x1xf32>
    %c2_i32 = arith.constant 2 : i32
    %71 = vector.broadcast %c2_i32 : i32 to vector<2x4xi32>
    %72 = arith.cmpi eq, %1, %71 : vector<2x4xi32>
    %73 = vector.shape_cast %70 : vector<2x1xf32> to vector<2x1xf32>
    %74 = vector.broadcast %73 : vector<2x1xf32> to vector<2x4xf32>
    %75 = arith.select %72, %74, %50 : vector<2x4xi1>, vector<2x4xf32>
    %c2_27 = arith.constant 2 : index
    %c0_28 = arith.constant 0 : index
    %76 = vector.load %arg2[%c2_27, %c0_28] : memref<4x32xf32, #tpu.memory_space<vmem>>, vector<1x32xf32>
    %77 = vector.broadcast %70 : vector<2x1xf32> to vector<2x32xf32>
    %78 = vector.broadcast %76 : vector<1x32xf32> to vector<2x32xf32>
    %79 = arith.mulf %77, %78 : vector<2x32xf32>
    %80 = arith.addf %55, %79 : vector<2x32xf32>
    %81 = arith.addf %56, %67 : vector<2x1xf32>
    %82 = vector.extract_strided_slice %0 {offsets = [0, 3], sizes = [2, 1], strides = [1, 1]} : vector<2x4xf32> to vector<2x1xf32>
    %cst_29 = arith.constant 0.000000e+00 : f32
    %83 = vector.broadcast %cst_29 : f32 to vector<2x32xf32>
    %84 = arith.maximumf %80, %83 : vector<2x32xf32>
    %c3 = arith.constant 3 : index
    %c0_30 = arith.constant 0 : index
    %c0_31 = arith.constant 0 : index
    %85 = vector.load %arg4[%c3, %c0_30, %c0_31] : memref<4x32x2xf32, #tpu.memory_space<vmem>>, vector<1x32x2xf32>
    %86 = vector.shape_cast %85 : vector<1x32x2xf32> to vector<32x2xf32>
    %c3_32 = arith.constant 3 : index
    %c0_33 = arith.constant 0 : index
    %87 = vector.load %arg5[%c3_32, %c0_33] : memref<4x2xf32, #tpu.memory_space<vmem>>, vector<1x2xf32>
    %cst_34 = arith.constant dense<0.000000e+00> : vector<2x2xf32>
    %88 = tpu.matmul %84, %86, %cst_34 {dimension_numbers = #tpu.dot_dimension_numbers<[1], [0], [0], [1], [0, 0, 1, 1], [], []>} : vector<2x32xf32>, vector<32x2xf32>, vector<2x2xf32> -> vector<2x2xf32>
    %89 = vector.broadcast %87 : vector<1x2xf32> to vector<2x2xf32>
    %90 = arith.addf %88, %89 : vector<2x2xf32>
    %91 = vector.extract_strided_slice %90 {offsets = [0, 0], sizes = [2, 1], strides = [1, 1]} : vector<2x2xf32> to vector<2x1xf32>
    %92 = vector.extract_strided_slice %90 {offsets = [0, 1], sizes = [2, 1], strides = [1, 1]} : vector<2x2xf32> to vector<2x1xf32>
    %93 = math.exp %92 : vector<2x1xf32>
    %94 = arith.mulf %82, %93 : vector<2x1xf32>
    %95 = arith.addf %94, %91 : vector<2x1xf32>
    %c3_i32 = arith.constant 3 : i32
    %96 = vector.broadcast %c3_i32 : i32 to vector<2x4xi32>
    %97 = arith.cmpi eq, %1, %96 : vector<2x4xi32>
    %98 = vector.shape_cast %95 : vector<2x1xf32> to vector<2x1xf32>
    %99 = vector.broadcast %98 : vector<2x1xf32> to vector<2x4xf32>
    %100 = arith.select %97, %99, %75 : vector<2x4xi1>, vector<2x4xf32>
    %101 = arith.addf %81, %92 : vector<2x1xf32>
    %c0_35 = arith.constant 0 : index
    %c0_36 = arith.constant 0 : index
    %102 = vector.load %arg6[%c0_35, %c0_36] : memref<2x4xf32, #tpu.memory_space<vmem>>, vector<2x4xf32>
    tpu.vector_store %arg6[%c0_35, %c0_36], %100 {strides = array<i32>} : memref<2x4xf32, #tpu.memory_space<vmem>>, vector<2x4xf32>,
    %c0_37 = arith.constant 0 : index
    %c0_38 = arith.constant 0 : index
    %103 = vector.load %arg7[%c0_37, %c0_38] : memref<2x1xf32, #tpu.memory_space<vmem>>, vector<2x1xf32>
    tpu.vector_store %arg7[%c0_37, %c0_38], %101 {strides = array<i32>} : memref<2x1xf32, #tpu.memory_space<vmem>>, vector<2x1xf32>,
    return
  }
  func.func @transform_0(%arg0: i32) -> (i32, i32) {
    %c0_i32 = arith.constant 0 : i32
    %c0_i32_0 = arith.constant 0 : i32
    return %arg0, %c0_i32 : i32, i32
  }
  func.func @transform_1(%arg0: i32) -> (i32, i32) {
    %c0_i32 = arith.constant 0 : i32
    %c0_i32_0 = arith.constant 0 : i32
    %c0_i32_1 = arith.constant 0 : i32
    return %c0_i32, %c0_i32_0 : i32, i32
  }
  func.func @transform_2(%arg0: i32) -> (i32, i32) {
    %c0_i32 = arith.constant 0 : i32
    %c0_i32_0 = arith.constant 0 : i32
    %c0_i32_1 = arith.constant 0 : i32
    return %c0_i32, %c0_i32_0 : i32, i32
  }
  func.func @transform_3(%arg0: i32) -> (i32, i32, i32) {
    %c0_i32 = arith.constant 0 : i32
    %c0_i32_0 = arith.constant 0 : i32
    %c0_i32_1 = arith.constant 0 : i32
    %c0_i32_2 = arith.constant 0 : i32
    return %c0_i32, %c0_i32_0, %c0_i32_1 : i32, i32, i32
  }
  func.func @transform_4(%arg0: i32) -> (i32, i32) {
    %c0_i32 = arith.constant 0 : i32
    %c0_i32_0 = arith.constant 0 : i32
    %c0_i32_1 = arith.constant 0 : i32
    return %c0_i32, %c0_i32_0 : i32, i32
  }
  func.func @transform_5(%arg0: i32) -> (i32, i32) {
    %c0_i32 = arith.constant 0 : i32
    %c0_i32_0 = arith.constant 0 : i32
    return %arg0, %c0_i32 : i32, i32
  }
  func.func @transform_6(%arg0: i32) -> (i32, i32) {
    %c0_i32 = arith.constant 0 : i32
    %c0_i32_0 = arith.constant 0 : i32
    return %arg0, %c0_i32 : i32, i32
  }
}

</mosaic_0001>

<llo_original>
// kernel: tpu_custom_call.1
$region0: #{tpu_custom_call.1}
  #allocation0 [shape = 'u32[]', space=smem, size = 0x4, offset = 0x4, fixed_abs, tag = 'smem constant byte address 0x4 - core index']
  #allocation1 [shape = 'u32[144,128]{1,0:T(1,128)}', space=vmem, size = 0x12000, scoped, tag = 'internal scratch']
  %s0 = inlined_call_operand.vmem [shape: f32[2,4], index: 0, kind: input, shape index: {}]
  %s1 = inlined_call_operand.vmem [shape: f32[4,32], index: 1, kind: input, shape index: {}]
  %s2 = inlined_call_operand.vmem [shape: f32[1,32], index: 2, kind: input, shape index: {}]
  %s3 = inlined_call_operand.vmem [shape: f32[4,32,2], index: 3, kind: input, shape index: {}]
  %s4 = inlined_call_operand.vmem [shape: f32[4,2], index: 4, kind: input, shape index: {}]
  %s5 = inlined_call_operand.hbm [shape: f32[2,4], index: 5, kind: output, shape index: {0}]
  %s6 = inlined_call_operand.vmem [shape: f32[2,1], index: 6, kind: output, shape index: {1}]
  %7 = xla_tuple %s5, %s6
  %s8 = sld [smem:[#allocation0]]
  $region38: #{tpu_custom_call.1} parent=0
    _
  %s10 = ssub.s32 1, %s8
  %s11 = scalar_select 0, %s10, %s8
  $region1: #{tpu_custom_call.1} parent=0
    #allocation2 [shape = 'u8[1024]{0}', space=vmem, size = 0x400, scoped, tag = 'output window, operand 0, single buffered']
    #allocation3 [shape = 's32[1]{0}', space=sflag, size = 0x4, scoped, tag = 'scoped memory for tpu_custom_call.1']
    %12 = vsyncpa [#allocation3], 0
    // Predicated region
    $region2: #{tpu_custom_call.1} parent=1 // pred_check
      _
    $region3: #{tpu_custom_call.1} parent=1 // pred_check_branch
      %14 = sbr.rel (0) target = $region5
    $region4: #{tpu_custom_call.1} parent=1 // pred_region
      _
    $region5: #{tpu_custom_call.1} parent=1 // pred_fallthru
      _
    // Predicated region
    $region6: #{tpu_custom_call.1} parent=1 // pred_check
      _
    $region7: #{tpu_custom_call.1} parent=1 // pred_check_branch
      %16 = sbr.rel (0) target = $region9
    $region8: #{tpu_custom_call.1} parent=1 // pred_region
      _
    $region9: #{tpu_custom_call.1} parent=1 // pred_fallthru
      _
    // Predicated region
    $region10: #{tpu_custom_call.1} parent=1 // pred_check
      _
    $region11: #{tpu_custom_call.1} parent=1 // pred_check_branch
      %18 = sbr.rel (0) target = $region13
    $region12: #{tpu_custom_call.1} parent=1 // pred_region
      _
    $region13: #{tpu_custom_call.1} parent=1 // pred_fallthru
      _
    // Predicated region
    $region14: #{tpu_custom_call.1} parent=1 // pred_check
      _
    $region15: #{tpu_custom_call.1} parent=1 // pred_check_branch
      %20 = sbr.rel (0) target = $region17
    $region16: #{tpu_custom_call.1} parent=1 // pred_region
      _
    $region17: #{tpu_custom_call.1} parent=1 // pred_fallthru
      _
    // Predicated region
    $region18: #{tpu_custom_call.1} parent=1 // pred_check
      _
    $region19: #{tpu_custom_call.1} parent=1 // pred_check_branch
      %22 = sbr.rel (0) target = $region21
    $region20: #{tpu_custom_call.1} parent=1 // pred_region
      _
    $region21: #{tpu_custom_call.1} parent=1 // pred_fallthru
      _
    %v23 = vld [vmem:[%s0] sm:$0x3]
    %v24 = vlaneseq
    %v25 = vand.u32 %v24, 127
    %v26 = vld [vmem:[%s2] sm:$0x1]
    %v28 = vlaneseq
    %v29 = vshrl.u32 %v28, 7
    %v30 = vsub.s32 0, %v29
    %v31 = vrot.slane %v26, %v30
    %v33 = vmax.f32 %v31, 0.0
    %v34 = vld [vmem:[%s3] sm:$0xff]
    %v35 = vld [vmem:[%s3 + $0x8] sm:$0xff]
    %v36 = vld [vmem:[%s3 + $0x10] sm:$0xff]
    %v37 = vld [vmem:[%s3 + $0x18] sm:$0xff]
    %v38 = vld [vmem:[%s4] sm:$0x1]
    %v39 = vlaneseq
    %v40 = vshrl.u32 %v39, 7
    %v41 = vsub.s32 0, %v40
    %v42 = vrot.slane %v38, %v41
    %vm43 = vcmask 261120
    %v45 = vsel %vm43, %v33, 0
    %47 = vmatprep.subr.mxu0 0.0
    %48 = vmatpush1.msra.mxu0 %v34
    %49 = vmatprep.subr.mxu0 0.0
    %50 = vmatpush1.msra.mxu0 %v35
    %51 = vmatprep.subr.mxu0 0.0
    %52 = vmatpush1.msra.mxu0 %v36
    %53 = vmatprep.subr.mxu0 0.0
    %54 = vmatpush1.msra.mxu0 %v37
    %55 = vmatprep.subr.mxu0 0.0
    %56 = vmatpush1.msra.mxu0 0.0
    %57 = vmatprep.subr.mxu0 0.0
    %58 = vmatpush1.msra.mxu0 0.0
    %59 = vmatprep.subr.mxu0 0.0
    %60 = vmatpush1.msra.mxu0 0.0
    %61 = vmatprep.subr.mxu0 0.0
    %62 = vmatpush1.msra.mxu0 0.0
    %63 = vmatprep.subr.mxu0 0.0
    %64 = vmatpush1.msra.mxu0 0.0
    %65 = vmatprep.subr.mxu0 0.0
    %66 = vmatpush1.msra.mxu0 0.0
    %67 = vmatprep.subr.mxu0 0.0
    %68 = vmatpush1.msra.mxu0 0.0
    %69 = vmatprep.subr.mxu0 0.0
    %70 = vmatpush1.msra.mxu0 0.0
    %71 = vmatprep.subr.mxu0 0.0
    %72 = vmatpush1.msra.mxu0 0.0
    %73 = vmatprep.subr.mxu0 0.0
    %74 = vmatpush1.msra.mxu0 0.0
    %75 = vmatprep.subr.mxu0 0.0
    %76 = vmatpush1.msra.mxu0 0.0
    %77 = vmatprep.subr.mxu0 0.0
    %78 = vmatpush1.msra.mxu0 0.0
    %79 = vmatprep.subr.mxu0 0.0
    %80 = vmatpush1.msra.mxu0 0.0
    %81 = vmatprep.subr.mxu0 0.0
    %82 = vmatpush1.msra.mxu0 0.0
    %83 = vmatprep.subr.mxu0 0.0
    %84 = vmatpush1.msra.mxu0 0.0
    %85 = vmatprep.subr.mxu0 0.0
    %86 = vmatpush1.msra.mxu0 0.0
    %87 = vmatprep.subr.mxu0 0.0
    %88 = vmatpush1.msra.mxu0 0.0
    %89 = vmatprep.subr.mxu0 0.0
    %90 = vmatpush1.msra.mxu0 0.0
    %91 = vmatprep.subr.mxu0 0.0
    %92 = vmatpush1.msra.mxu0 0.0
    %93 = vmatprep.subr.mxu0 0.0
    %94 = vmatpush1.msra.mxu0 0.0
    %95 = vmatprep.subr.mxu0 0.0
    %96 = vmatpush1.msra.mxu0 0.0
    %97 = vmatprep.subr.mxu0 0.0
    %98 = vmatpush1.msra.mxu0 0.0
    %99 = vmatprep.subr.mxu0 0.0
    %100 = vmatpush1.msra.mxu0 0.0
    %101 = vmatprep.subr.mxu0 0.0
    %102 = vmatpush1.msra.mxu0 0.0
    %103 = vmatprep.subr.mxu0 0.0
    %104 = vmatpush1.msra.mxu0 0.0
    %105 = vmatprep.subr.mxu0 0.0
    %106 = vmatpush1.msra.mxu0 0.0
    %107 = vmatprep.subr.mxu0 0.0
    %108 = vmatpush1.msra.mxu0 0.0
    %109 = vmatprep.subr.mxu0 0.0
    %110 = vmatpush1.msra.mxu0 0.0
    %111 = vmatprep.mubr.f32.mxu0 0.0
    %112 = vmatmul.mubr.f32.gmra.mrb[0].mxu0 %v45
    %v113 = vpop.f32.mrb[0].mxu0
    %v114 = vadd.f32 %v42, %v113
    %v115 = vpop.f32.mrb[0].mxu0
    %116 = vdwg.mxu0
    %v117 = vmul.f32 %v114, 1.442695
    %v118 = vpow.pop %v117
    %120 = vrot.lane.b32.xlu0 %v118, 127
    %v121 = vpop.permute.xlu0 %120
    %v123 = vmul.f32 %v23, %v121
    %v124 = vadd.f32 %v123, %v114
    %vm125 = vcmp.eq.s32.totalorder %v25, 0
    %127 = vset.pattern.permute.xlu0 0
    %128 = vperm.xlu0 %127, %v124
    %v129 = vpop.permute.xlu0 %128
    %v131 = vsel %vm125, %v129, 0.0
    %v132 = vld [vmem:[%s1] sm:$0x1]
    %v133 = vlaneseq
    %v134 = vshrl.u32 %v133, 7
    %v135 = vsub.s32 0, %v134
    %v136 = vrot.slane %v132, %v135
    %v137 = vmul.f32 %v129, %v136
    %v138 = vadd.f32 %v31, %v137
    %v139 = vadd.f32 %v114, 0.0
    %v140 = vmax.f32 %v138, 0.0
    %s141 = scalar_lea.vmem %s3, 32
    %v142 = vld [vmem:[%s141] sm:$0xff]
    %v143 = vld [vmem:[%s141 + $0x8] sm:$0xff]
    %v144 = vld [vmem:[%s141 + $0x10] sm:$0xff]
    %v145 = vld [vmem:[%s141 + $0x18] sm:$0xff]
    %v146 = vld [vmem:[%s4 + $0x1] sm:$0x1]
    %v147 = vlaneseq
    %v148 = vshrl.u32 %v147, 7
    %v149 = vsub.s32 0, %v148
    %v150 = vrot.slane %v146, %v149
    %v152 = vsel %vm43, %v140, 0
    %154 = vmatprep.subr.mxu0 0.0
    %155 = vmatpush1.msra.mxu0 %v142
    %156 = vmatprep.subr.mxu0 0.0
    %157 = vmatpush1.msra.mxu0 %v143
    %158 = vmatprep.subr.mxu0 0.0
    %159 = vmatpush1.msra.mxu0 %v144
    %160 = vmatprep.subr.mxu0 0.0
    %161 = vmatpush1.msra.mxu0 %v145
    %162 = vmatprep.subr.mxu0 0.0
    %163 = vmatpush1.msra.mxu0 0.0
    %164 = vmatprep.subr.mxu0 0.0
    %165 = vmatpush1.msra.mxu0 0.0
    %166 = vmatprep.subr.mxu0 0.0
    %167 = vmatpush1.msra.mxu0 0.0
    %168 = vmatprep.subr.mxu0 0.0
    %169 = vmatpush1.msra.mxu0 0.0
    %170 = vmatprep.subr.mxu0 0.0
    %171 = vmatpush1.msra.mxu0 0.0
    %172 = vmatprep.subr.mxu0 0.0
    %173 = vmatpush1.msra.mxu0 0.0
    %174 = vmatprep.subr.mxu0 0.0
    %175 = vmatpush1.msra.mxu0 0.0
    %176 = vmatprep.subr.mxu0 0.0
    %177 = vmatpush1.msra.mxu0 0.0
    %178 = vmatprep.subr.mxu0 0.0
    %179 = vmatpush1.msra.mxu0 0.0
    %180 = vmatprep.subr.mxu0 0.0
    %181 = vmatpush1.msra.mxu0 0.0
    %182 = vmatprep.subr.mxu0 0.0
    %183 = vmatpush1.msra.mxu0 0.0
    %184 = vmatprep.subr.mxu0 0.0
    %185 = vmatpush1.msra.mxu0 0.0
    %186 = vmatprep.subr.mxu0 0.0
    %187 = vmatpush1.msra.mxu0 0.0
    %188 = vmatprep.subr.mxu0 0.0
    %189 = vmatpush1.msra.mxu0 0.0
    %190 = vmatprep.subr.mxu0 0.0
    %191 = vmatpush1.msra.mxu0 0.0
    %192 = vmatprep.subr.mxu0 0.0
    %193 = vmatpush1.msra.mxu0 0.0
    %194 = vmatprep.subr.mxu0 0.0
    %195 = vmatpush1.msra.mxu0 0.0
    %196 = vmatprep.subr.mxu0 0.0
    %197 = vmatpush1.msra.mxu0 0.0
    %198 = vmatprep.subr.mxu0 0.0
    %199 = vmatpush1.msra.mxu0 0.0
    %200 = vmatprep.subr.mxu0 0.0
    %201 = vmatpush1.msra.mxu0 0.0
    %202 = vmatprep.subr.mxu0 0.0
    %203 = vmatpush1.msra.mxu0 0.0
    %204 = vmatprep.subr.mxu0 0.0
    %205 = vmatpush1.msra.mxu0 0.0
    %206 = vmatprep.subr.mxu0 0.0
    %207 = vmatpush1.msra.mxu0 0.0
    %208 = vmatprep.subr.mxu0 0.0
    %209 = vmatpush1.msra.mxu0 0.0
    %210 = vmatprep.subr.mxu0 0.0
    %211 = vmatpush1.msra.mxu0 0.0
    %212 = vmatprep.subr.mxu0 0.0
    %213 = vmatpush1.msra.mxu0 0.0
    %214 = vmatprep.subr.mxu0 0.0
    %215 = vmatpush1.msra.mxu0 0.0
    %216 = vmatprep.subr.mxu0 0.0
    %217 = vmatpush1.msra.mxu0 0.0
    %218 = vmatprep.mubr.f32.mxu0 0.0
    %219 = vmatmul.mubr.f32.gmra.mrb[0].mxu0 %v152
    %v220 = vpop.f32.mrb[0].mxu0
    %v221 = vadd.f32 %v150, %v220
    %v222 = vpop.f32.mrb[0].mxu0
    %223 = vdwg.mxu0
    %v224 = vmul.f32 %v221, 1.442695
    %v225 = vpow.pop %v224
    %v226 = vmul.f32 %v23, %v225
    %228 = vrot.lane.b32.xlu0 %v221, 1
    %v229 = vpop.permute.xlu0 %228
    %v231 = vadd.f32 %v226, %v229
    %vm232 = vcmp.eq.s32.totalorder %v25, 1
    %234 = vset.pattern.permute.xlu0 1
    %235 = vperm.xlu0 %234, %v231
    %v236 = vpop.permute.xlu0 %235
    %v238 = vsel %vm232, %v236, %v131
    %v239 = vld [vmem:[%s1 + $0x1] sm:$0x1]
    %v240 = vlaneseq
    %v241 = vshrl.u32 %v240, 7
    %v242 = vsub.s32 0, %v241
    %v243 = vrot.slane %v239, %v242
    %v244 = vmul.f32 %v236, %v243
    %v245 = vadd.f32 %v138, %v244
    %v246 = vadd.f32 %v139, %v221
    %v247 = vmax.f32 %v245, 0.0
    %s248 = scalar_lea.vmem %s3, 64
    %v249 = vld [vmem:[%s248] sm:$0xff]
    %v250 = vld [vmem:[%s248 + $0x8] sm:$0xff]
    %v251 = vld [vmem:[%s248 + $0x10] sm:$0xff]
    %v252 = vld [vmem:[%s248 + $0x18] sm:$0xff]
    %v253 = vld [vmem:[%s4 + $0x2] sm:$0x1]
    %v254 = vlaneseq
    %v255 = vshrl.u32 %v254, 7
    %v256 = vsub.s32 0, %v255
    %v257 = vrot.slane %v253, %v256
    %v259 = vsel %vm43, %v247, 0
    %261 = vmatprep.subr.mxu0 0.0
    %262 = vmatpush1.msra.mxu0 %v249
    %263 = vmatprep.subr.mxu0 0.0
    %264 = vmatpush1.msra.mxu0 %v250
    %265 = vmatprep.subr.mxu0 0.0
    %266 = vmatpush1.msra.mxu0 %v251
    %267 = vmatprep.subr.mxu0 0.0
    %268 = vmatpush1.msra.mxu0 %v252
    %269 = vmatprep.subr.mxu0 0.0
    %270 = vmatpush1.msra.mxu0 0.0
    %271 = vmatprep.subr.mxu0 0.0
    %272 = vmatpush1.msra.mxu0 0.0
    %273 = vmatprep.subr.mxu0 0.0
    %274 = vmatpush1.msra.mxu0 0.0
    %275 = vmatprep.subr.mxu0 0.0
    %276 = vmatpush1.msra.mxu0 0.0
    %277 = vmatprep.subr.mxu0 0.0
    %278 = vmatpush1.msra.mxu0 0.0
    %279 = vmatprep.subr.mxu0 0.0
    %280 = vmatpush1.msra.mxu0 0.0
    %281 = vmatprep.subr.mxu0 0.0
    %282 = vmatpush1.msra.mxu0 0.0
    %283 = vmatprep.subr.mxu0 0.0
    %284 = vmatpush1.msra.mxu0 0.0
    %285 = vmatprep.subr.mxu0 0.0
    %286 = vmatpush1.msra.mxu0 0.0
    %287 = vmatprep.subr.mxu0 0.0
    %288 = vmatpush1.msra.mxu0 0.0
    %289 = vmatprep.subr.mxu0 0.0
    %290 = vmatpush1.msra.mxu0 0.0
    %291 = vmatprep.subr.mxu0 0.0
    %292 = vmatpush1.msra.mxu0 0.0
    %293 = vmatprep.subr.mxu0 0.0
    %294 = vmatpush1.msra.mxu0 0.0
    %295 = vmatprep.subr.mxu0 0.0
    %296 = vmatpush1.msra.mxu0 0.0
    %297 = vmatprep.subr.mxu0 0.0
    %298 = vmatpush1.msra.mxu0 0.0
    %299 = vmatprep.subr.mxu0 0.0
    %300 = vmatpush1.msra.mxu0 0.0
    %301 = vmatprep.subr.mxu0 0.0
    %302 = vmatpush1.msra.mxu0 0.0
    %303 = vmatprep.subr.mxu0 0.0
    %304 = vmatpush1.msra.mxu0 0.0
    %305 = vmatprep.subr.mxu0 0.0
    %306 = vmatpush1.msra.mxu0 0.0
    %307 = vmatprep.subr.mxu0 0.0
    %308 = vmatpush1.msra.mxu0 0.0
    %309 = vmatprep.subr.mxu0 0.0
    %310 = vmatpush1.msra.mxu0 0.0
    %311 = vmatprep.subr.mxu0 0.0
    %312 = vmatpush1.msra.mxu0 0.0
    %313 = vmatprep.subr.mxu0 0.0
    %314 = vmatpush1.msra.mxu0 0.0
    %315 = vmatprep.subr.mxu0 0.0
    %316 = vmatpush1.msra.mxu0 0.0
    %317 = vmatprep.subr.mxu0 0.0
    %318 = vmatpush1.msra.mxu0 0.0
    %319 = vmatprep.subr.mxu0 0.0
    %320 = vmatpush1.msra.mxu0 0.0
    %321 = vmatprep.subr.mxu0 0.0
    %322 = vmatpush1.msra.mxu0 0.0
    %323 = vmatprep.subr.mxu0 0.0
    %324 = vmatpush1.msra.mxu0 0.0
    %325 = vmatprep.mubr.f32.mxu0 0.0
    %326 = vmatmul.mubr.f32.gmra.mrb[0].mxu0 %v259
    %v327 = vpop.f32.mrb[0].mxu0
    %v328 = vadd.f32 %v257, %v327
    %v329 = vpop.f32.mrb[0].mxu0
    %330 = vdwg.mxu0
    %v331 = vmul.f32 %v328, 1.442695
    %v332 = vpow.pop %v331
    %334 = vrot.lane.b32.xlu0 %v332, 1
    %v335 = vpop.permute.xlu0 %334
    %v337 = vmul.f32 %v23, %v335
    %339 = vrot.lane.b32.xlu0 %v328, 2
    %v340 = vpop.permute.xlu0 %339
    %v342 = vadd.f32 %v337, %v340
    %vm343 = vcmp.eq.s32.totalorder %v25, 2
    %345 = vset.pattern.permute.xlu0 2
    %346 = vperm.xlu0 %345, %v342
    %v347 = vpop.permute.xlu0 %346
    %v349 = vsel %vm343, %v347, %v238
    %v350 = vld [vmem:[%s1 + $0x2] sm:$0x1]
    %v351 = vlaneseq
    %v352 = vshrl.u32 %v351, 7
    %v353 = vsub.s32 0, %v352
    %v354 = vrot.slane %v350, %v353
    %v355 = vmul.f32 %v347, %v354
    %v356 = vadd.f32 %v245, %v355
    %v357 = vadd.f32 %v246, %v328
    %v358 = vmax.f32 %v356, 0.0
    %s359 = scalar_lea.vmem %s3, 96
    %v360 = vld [vmem:[%s359] sm:$0xff]
    %v361 = vld [vmem:[%s359 + $0x8] sm:$0xff]
    %v362 = vld [vmem:[%s359 + $0x10] sm:$0xff]
    %v363 = vld [vmem:[%s359 + $0x18] sm:$0xff]
    %v364 = vld [vmem:[%s4 + $0x3] sm:$0x1]
    %v365 = vlaneseq
    %v366 = vshrl.u32 %v365, 7
    %v367 = vsub.s32 0, %v366
    %v368 = vrot.slane %v364, %v367
    %v370 = vsel %vm43, %v358, 0
    %372 = vmatprep.subr.mxu0 0.0
    %373 = vmatpush1.msra.mxu0 %v360
    %374 = vmatprep.subr.mxu0 0.0
    %375 = vmatpush1.msra.mxu0 %v361
    %376 = vmatprep.subr.mxu0 0.0
    %377 = vmatpush1.msra.mxu0 %v362
    %378 = vmatprep.subr.mxu0 0.0
    %379 = vmatpush1.msra.mxu0 %v363
    %380 = vmatprep.subr.mxu0 0.0
    %381 = vmatpush1.msra.mxu0 0.0
    %382 = vmatprep.subr.mxu0 0.0
    %383 = vmatpush1.msra.mxu0 0.0
    %384 = vmatprep.subr.mxu0 0.0
    %385 = vmatpush1.msra.mxu0 0.0
    %386 = vmatprep.subr.mxu0 0.0
    %387 = vmatpush1.msra.mxu0 0.0
    %388 = vmatprep.subr.mxu0 0.0
    %389 = vmatpush1.msra.mxu0 0.0
    %390 = vmatprep.subr.mxu0 0.0
    %391 = vmatpush1.msra.mxu0 0.0
    %392 = vmatprep.subr.mxu0 0.0
    %393 = vmatpush1.msra.mxu0 0.0
    %394 = vmatprep.subr.mxu0 0.0
    %395 = vmatpush1.msra.mxu0 0.0
    %396 = vmatprep.subr.mxu0 0.0
    %397 = vmatpush1.msra.mxu0 0.0
    %398 = vmatprep.subr.mxu0 0.0
    %399 = vmatpush1.msra.mxu0 0.0
    %400 = vmatprep.subr.mxu0 0.0
    %401 = vmatpush1.msra.mxu0 0.0
    %402 = vmatprep.subr.mxu0 0.0
    %403 = vmatpush1.msra.mxu0 0.0
    %404 = vmatprep.subr.mxu0 0.0
    %405 = vmatpush1.msra.mxu0 0.0
    %406 = vmatprep.subr.mxu0 0.0
    %407 = vmatpush1.msra.mxu0 0.0
    %408 = vmatprep.subr.mxu0 0.0
    %409 = vmatpush1.msra.mxu0 0.0
    %410 = vmatprep.subr.mxu0 0.0
    %411 = vmatpush1.msra.mxu0 0.0
    %412 = vmatprep.subr.mxu0 0.0
    %413 = vmatpush1.msra.mxu0 0.0
    %414 = vmatprep.subr.mxu0 0.0
    %415 = vmatpush1.msra.mxu0 0.0
    %416 = vmatprep.subr.mxu0 0.0
    %417 = vmatpush1.msra.mxu0 0.0
    %418 = vmatprep.subr.mxu0 0.0
    %419 = vmatpush1.msra.mxu0 0.0
    %420 = vmatprep.subr.mxu0 0.0
    %421 = vmatpush1.msra.mxu0 0.0
    %422 = vmatprep.subr.mxu0 0.0
    %423 = vmatpush1.msra.mxu0 0.0
    %424 = vmatprep.subr.mxu0 0.0
    %425 = vmatpush1.msra.mxu0 0.0
    %426 = vmatprep.subr.mxu0 0.0
    %427 = vmatpush1.msra.mxu0 0.0
    %428 = vmatprep.subr.mxu0 0.0
    %429 = vmatpush1.msra.mxu0 0.0
    %430 = vmatprep.subr.mxu0 0.0
    %431 = vmatpush1.msra.mxu0 0.0
    %432 = vmatprep.subr.mxu0 0.0
    %433 = vmatpush1.msra.mxu0 0.0
    %434 = vmatprep.subr.mxu0 0.0
    %435 = vmatpush1.msra.mxu0 0.0
    %436 = vmatprep.mubr.f32.mxu0 0.0
    %437 = vmatmul.mubr.f32.gmra.mrb[0].mxu0 %v370
    %v438 = vpop.f32.mrb[0].mxu0
    %v439 = vadd.f32 %v368, %v438
    %v440 = vpop.f32.mrb[0].mxu0
    %441 = vdwg.mxu0
    %v442 = vmul.f32 %v439, 1.442695
    %v443 = vpow.pop %v442
    %445 = vrot.lane.b32.xlu0 %v443, 2
    %v446 = vpop.permute.xlu0 %445
    %v448 = vmul.f32 %v23, %v446
    %450 = vrot.lane.b32.xlu0 %v439, 3
    %v451 = vpop.permute.xlu0 %450
    %v453 = vadd.f32 %v448, %v451
    %vm454 = vcmp.eq.s32.totalorder %v25, 3
    %456 = vset.pattern.permute.xlu0 3
    %457 = vperm.xlu0 %456, %v453
    %v458 = vpop.permute.xlu0 %457
    %v460 = vsel %vm454, %v458, %v349
    %v461 = vadd.f32 %v357, %v439
    %vm462 = vcmask 25600
    %463 = vst.msk [vmem:[#allocation2] sm:$0x3] %vm462, %v460
    %465 = vrot.lane.b32.xlu0 %v461, 127
    %v466 = vpop.permute.xlu0 %465
    %vm468 = vcmask 1024
    %469 = vst.msk [vmem:[%s6] sm:$0x3] %vm468, %v466
    // Predicated region
    $region22: #{tpu_custom_call.1} parent=1 // pred_check
      _
    $region23: #{tpu_custom_call.1} parent=1 // pred_check_branch
      %471 = sbr.rel (0) target = $region25
    $region24: #{tpu_custom_call.1} parent=1 // pred_region
      %s473 = ssub.s32 32, 32
      %474 = vsyncadd [#allocation3], %s473
      %s476 = sshll.u32 [#allocation2], 4
      %s477 = int_to_ptr.vmem [resolvable:$true] %s476
      %479 = dma.vmem_to_hbm [thread:$0]  %s477, 32, %s5, [#allocation3]
    $region25: #{tpu_custom_call.1} parent=1 // pred_fallthru
      _
    // Predicated region
    $region26: #{tpu_custom_call.1} parent=1 // pred_check
      _
    $region27: #{tpu_custom_call.1} parent=1 // pred_check_branch
      %481 = sbr.rel (0) target = $region29
    $region28: #{tpu_custom_call.1} parent=1 // pred_region
      _
    $region29: #{tpu_custom_call.1} parent=1 // pred_fallthru
      _
    // Predicated region
    $region30: #{tpu_custom_call.1} parent=1 // pred_check
      _
    $region31: #{tpu_custom_call.1} parent=1 // pred_check_branch
      %483 = sbr.rel (0) target = $region33
    $region32: #{tpu_custom_call.1} parent=1 // pred_region
      %484 = dma.done [#allocation3], 32
    $region33: #{tpu_custom_call.1} parent=1 // pred_fallthru
      _
    // Predicated region
    $region34: #{tpu_custom_call.1} parent=1 // pred_check
      _
    $region35: #{tpu_custom_call.1} parent=1 // pred_check_branch
      %486 = sbr.rel (0) target = $region37
    $region36: #{tpu_custom_call.1} parent=1 // pred_region
      _
    $region37: #{tpu_custom_call.1} parent=1 // pred_fallthru
      _
    %487 = vsyncpa [#allocation3], 1

</llo_original>
